<compile_context>
chip_gen: v5e
topology: v5e:2x2
jax: 0.10.0
libtpu: 0.0.40
codegen_flags: <defaults>
</compile_context>

<pallas_src>
import functools

import jax
import jax.numpy as jnp
from jax.experimental import pallas as pl
from jax.experimental.pallas import tpu as pltpu


def s3_kernel(alpha_ref, w_ref, b_ref, feat_ref, audio_ref, out_ref):
    """One (C, tn) lane-dense tile of one batch element.

    alpha_ref : (1, 1)  SMEM  -- PReLU slope
    w_ref     : (C, C)  SMEM  -- 1x1 conv weight, (C_out, C_in)
    b_ref     : (1, C)  SMEM  -- 1x1 conv bias
    feat_ref / audio_ref / out_ref : (C, tn) VMEM, spatial axis on lanes
    """
    C, _ = feat_ref.shape
    h = C // 2
    alpha = alpha_ref[0, 0]

    x = feat_ref[...].astype(jnp.float32)
    x = jnp.where(x > 0, x, alpha * x)                       # PReLU

    # 1x1 conv (+ ReLU) as C*C scalar-weighted VPU FMAs; channels live on the
    # sublane axis so every row is a full-width lane vector.  Weights come from
    # SMEM as cheap scalar loads.
    m = []
    for co in range(C):
        acc = w_ref[co, 0] * x[0:1, :]
        for ci in range(1, C):
            acc = acc + w_ref[co, ci] * x[ci:ci + 1, :]
        m.append(jnp.maximum(acc + b_ref[0, co], 0.0))        # ReLU

    a = audio_ref[...].astype(jnp.float32)

    # Complex multiplication of the mask with the audio embedding.  The
    # real/imag split is along the channel (sublane) axis, not the lane axis,
    # so this stays on the VPU and finishes with one unmasked full-width store.
    rows = []
    for j in range(h):                                        # real part
        rows.append(m[j] * a[j:j + 1, :] - m[j + h] * a[j + h:j + h + 1, :])
    for j in range(h):                                        # imaginary part
        rows.append(m[j] * a[j + h:j + h + 1, :] + m[j + h] * a[j:j + 1, :])

    out_ref[...] = jnp.concatenate(rows, axis=0).astype(out_ref.dtype)


def _pick_tile(n_padded, tn_max):
    """Largest power-of-two multiple of 128 that divides n_padded, is <= tn_max,
    and keeps at least 2 tiles along N (so v7x's two TensorCores both get work)."""
    tn = 128
    while (tn * 2 <= min(tn_max, n_padded)
           and n_padded % (tn * 2) == 0
           and n_padded // (tn * 2) >= 2):
        tn *= 2
    return tn


@functools.partial(jax.jit, static_argnames=("tn_max",))
def s3_forward(features, audio_embed, w, b, alpha, *, tn_max=16384):
    """features, audio_embed: (B, C, T, F) NCHW. w: (C_out, C_in). b: (C,)."""
    B, C, T, F = features.shape
    assert C % 2 == 0, "channel dim must be even for the real/imag split"
    assert w.shape == (C, C)
    N = T * F

    # NCHW is already the right memory order for lanes-on-spatial: reshape only
    # (free), no HBM transpose on input or output.
    feat = features.reshape(B, C, N)
    audio = audio_embed.reshape(B, C, N)

    Np = ((N + 127) // 128) * 128
    if Np != N:
        # Only hit when T*F is not a multiple of 128.  Padded audio columns are
        # zero, so padded outputs are exactly zero and are sliced off below.
        feat = jnp.pad(feat, ((0, 0), (0, 0), (0, Np - N)))
        audio = jnp.pad(audio, ((0, 0), (0, 0), (0, Np - N)))

    tn = _pick_tile(Np, tn_max)

    alpha_s = jnp.reshape(alpha, (1, 1)).astype(jnp.float32)
    w_s = w.astype(jnp.float32)
    b_s = jnp.reshape(b, (1, C)).astype(jnp.float32)

    out3d = pl.pallas_call(
        s3_kernel,
        out_shape=jax.ShapeDtypeStruct((B, C, Np), features.dtype),
        grid_spec=pltpu.PrefetchScalarGridSpec(
            num_scalar_prefetch=0,
            grid=(B, Np // tn),
            in_specs=[
                pl.BlockSpec(memory_space=pltpu.MemorySpace.SMEM),        # alpha
                pl.BlockSpec(memory_space=pltpu.MemorySpace.SMEM),        # conv weight
                pl.BlockSpec(memory_space=pltpu.MemorySpace.SMEM),        # conv bias
                pl.BlockSpec((None, C, tn), lambda bi, ni: (bi, 0, ni)),  # features
                pl.BlockSpec((None, C, tn), lambda bi, ni: (bi, 0, ni)),  # audio
            ],
            out_specs=pl.BlockSpec((None, C, tn), lambda bi, ni: (bi, 0, ni)),
        ),
        compiler_params=pltpu.CompilerParams(
            dimension_semantics=("parallel", "parallel")),
    )(alpha_s, w_s, b_s, feat, audio)

    if Np != N:
        out3d = out3d[:, :, :N]
    return out3d.reshape(B, C, T, F)


def s3_reference(features, audio_embed, w, b, alpha):
    """Plain-JAX reference matching the PyTorch forward (w is (C_out, C_in))."""
    C = features.shape[1]
    x = jnp.where(features > 0, features, alpha * features)
    m = jnp.einsum("oc,bctf->botf", w, x) + b[None, :, None, None]
    m = jnp.maximum(m, 0.0)
    h = C // 2
    m_r, m_i = m[:, :h], m[:, h:]
    a_r, a_i = audio_embed[:, :h], audio_embed[:, h:]
    out_r = m_r * a_r - m_i * a_i
    out_i = m_r * a_i + m_i * a_r
    return jnp.concatenate([out_r, out_i], axis=1)


if __name__ == "__main__":
    key = jax.random.PRNGKey(0)
    k_feat, k_audio, k_w, k_b = jax.random.split(key, 4)

    B, C, T, F = 2, 4, 16, 16  # small shapes consistent with (B, C_a, T_a, F)

    features = jax.random.normal(k_feat, (B, C, T, F), dtype=jnp.float32)
    audio_embed = jax.random.normal(k_audio, (B, C, T, F), dtype=jnp.float32)

    # Parameters (deterministic, synthetic):
    #   conv weight (C_out, C_in) for the 1x1 conv (torch (C_out, C_in, 1, 1) squeezed)
    w = jax.random.normal(k_w, (C, C), dtype=jnp.float32) * 0.5
    b = jax.random.normal(k_b, (C,), dtype=jnp.float32) * 0.1
    alpha = jnp.float32(0.25)  # nn.PReLU() default init

    out = s3_forward(features, audio_embed, w, b, alpha)
    out = jax.block_until_ready(out)

    ref = s3_reference(features, audio_embed, w, b, alpha)
    assert out.shape == (B, C, T, F), out.shape
    assert jnp.allclose(out, ref, atol=1e-5, rtol=1e-5), "mismatch vs reference"

    print("KERNEL_OK")
</pallas_src>

<mosaic_0001>
module attributes {stable_mosaic.version = 11 : i64} {
  func.func @s3_kernel(%arg0: i32, %arg1: i32, %arg2: memref<1x1xf32, #tpu.memory_space<smem>>, %arg3: memref<4x4xf32, #tpu.memory_space<smem>>, %arg4: memref<1x4xf32, #tpu.memory_space<smem>>, %arg5: memref<1x4x128xf32, #tpu.memory_space<vmem>>, %arg6: memref<1x4x128xf32, #tpu.memory_space<vmem>>, %arg7: memref<1x4x128xf32, #tpu.memory_space<vmem>>) attributes {dimension_semantics = [#tpu.dimension_semantics<parallel>, #tpu.dimension_semantics<parallel>], iteration_bounds = array<i64: 2, 2>, scalar_prefetch = 0 : i64, scratch_operands = 0 : i64, tpu.core_type = #tpu.core_type<tc>, window_params = [{transform_indices = @transform_0, window_bounds = array<i64: 1, 1>}, {transform_indices = @transform_1, window_bounds = array<i64: 4, 4>}, {transform_indices = @transform_2, window_bounds = array<i64: 1, 4>}, {transform_indices = @transform_3, window_bounds = array<i64: 1, 4, 128>}, {transform_indices = @transform_4, window_bounds = array<i64: 1, 4, 128>}, {transform_indices = @transform_5, window_bounds = array<i64: 1, 4, 128>}]} {
    %c0 = arith.constant 0 : index
    %c0_0 = arith.constant 0 : index
    %0 = memref.load %arg2[%c0, %c0_0] : memref<1x1xf32, #tpu.memory_space<smem>>
    %c0_1 = arith.constant 0 : index
    %c0_2 = arith.constant 0 : index
    %c0_3 = arith.constant 0 : index
    %1 = vector.load %arg5[%c0_1, %c0_2, %c0_3] : memref<1x4x128xf32, #tpu.memory_space<vmem>>, vector<1x4x128xf32>
    %2 = vector.shape_cast %1 : vector<1x4x128xf32> to vector<4x128xf32>
    %cst = arith.constant 0.000000e+00 : f32
    %3 = vector.broadcast %cst : f32 to vector<4x128xf32>
    %4 = arith.cmpf ogt, %2, %3 : vector<4x128xf32>
    %5 = vector.broadcast %0 : f32 to vector<4x128xf32>
    %6 = arith.mulf %5, %2 : vector<4x128xf32>
    %7 = arith.select %4, %2, %6 : vector<4x128xi1>, vector<4x128xf32>
    %c0_4 = arith.constant 0 : index
    %c0_5 = arith.constant 0 : index
    %8 = memref.load %arg3[%c0_4, %c0_5] : memref<4x4xf32, #tpu.memory_space<smem>>
    %9 = vector.extract_strided_slice %7 {offsets = [0, 0], sizes = [1, 128], strides = [1, 1]} : vector<4x128xf32> to vector<1x128xf32>
    %10 = vector.broadcast %8 : f32 to vector<1x128xf32>
    %11 = arith.mulf %10, %9 : vector<1x128xf32>
    %c0_6 = arith.constant 0 : index
    %c1 = arith.constant 1 : index
    %12 = memref.load %arg3[%c0_6, %c1] : memref<4x4xf32, #tpu.memory_space<smem>>
    %13 = vector.extract_strided_slice %7 {offsets = [1, 0], sizes = [1, 128], strides = [1, 1]} : vector<4x128xf32> to vector<1x128xf32>
    %14 = vector.broadcast %12 : f32 to vector<1x128xf32>
    %15 = arith.mulf %14, %13 : vector<1x128xf32>
    %16 = arith.addf %11, %15 : vector<1x128xf32>
    %c0_7 = arith.constant 0 : index
    %c2 = arith.constant 2 : index
    %17 = memref.load %arg3[%c0_7, %c2] : memref<4x4xf32, #tpu.memory_space<smem>>
    %18 = vector.extract_strided_slice %7 {offsets = [2, 0], sizes = [1, 128], strides = [1, 1]} : vector<4x128xf32> to vector<1x128xf32>
    %19 = vector.broadcast %17 : f32 to vector<1x128xf32>
    %20 = arith.mulf %19, %18 : vector<1x128xf32>
    %21 = arith.addf %16, %20 : vector<1x128xf32>
    %c0_8 = arith.constant 0 : index
    %c3 = arith.constant 3 : index
    %22 = memref.load %arg3[%c0_8, %c3] : memref<4x4xf32, #tpu.memory_space<smem>>
    %23 = vector.extract_strided_slice %7 {offsets = [3, 0], sizes = [1, 128], strides = [1, 1]} : vector<4x128xf32> to vector<1x128xf32>
    %24 = vector.broadcast %22 : f32 to vector<1x128xf32>
    %25 = arith.mulf %24, %23 : vector<1x128xf32>
    %26 = arith.addf %21, %25 : vector<1x128xf32>
    %c0_9 = arith.constant 0 : index
    %c0_10 = arith.constant 0 : index
    %27 = memref.load %arg4[%c0_9, %c0_10] : memref<1x4xf32, #tpu.memory_space<smem>>
    %28 = vector.broadcast %27 : f32 to vector<1x128xf32>
    %29 = arith.addf %26, %28 : vector<1x128xf32>
    %cst_11 = arith.constant 0.000000e+00 : f32
    %30 = vector.broadcast %cst_11 : f32 to vector<1x128xf32>
    %31 = arith.maximumf %29, %30 : vector<1x128xf32>
    %c1_12 = arith.constant 1 : index
    %c0_13 = arith.constant 0 : index
    %32 = memref.load %arg3[%c1_12, %c0_13] : memref<4x4xf32, #tpu.memory_space<smem>>
    %33 = vector.extract_strided_slice %7 {offsets = [0, 0], sizes = [1, 128], strides = [1, 1]} : vector<4x128xf32> to vector<1x128xf32>
    %34 = vector.broadcast %32 : f32 to vector<1x128xf32>
    %35 = arith.mulf %34, %33 : vector<1x128xf32>
    %c1_14 = arith.constant 1 : index
    %c1_15 = arith.constant 1 : index
    %36 = memref.load %arg3[%c1_14, %c1_15] : memref<4x4xf32, #tpu.memory_space<smem>>
    %37 = vector.extract_strided_slice %7 {offsets = [1, 0], sizes = [1, 128], strides = [1, 1]} : vector<4x128xf32> to vector<1x128xf32>
    %38 = vector.broadcast %36 : f32 to vector<1x128xf32>
    %39 = arith.mulf %38, %37 : vector<1x128xf32>
    %40 = arith.addf %35, %39 : vector<1x128xf32>
    %c1_16 = arith.constant 1 : index
    %c2_17 = arith.constant 2 : index
    %41 = memref.load %arg3[%c1_16, %c2_17] : memref<4x4xf32, #tpu.memory_space<smem>>
    %42 = vector.extract_strided_slice %7 {offsets = [2, 0], sizes = [1, 128], strides = [1, 1]} : vector<4x128xf32> to vector<1x128xf32>
    %43 = vector.broadcast %41 : f32 to vector<1x128xf32>
    %44 = arith.mulf %43, %42 : vector<1x128xf32>
    %45 = arith.addf %40, %44 : vector<1x128xf32>
    %c1_18 = arith.constant 1 : index
    %c3_19 = arith.constant 3 : index
    %46 = memref.load %arg3[%c1_18, %c3_19] : memref<4x4xf32, #tpu.memory_space<smem>>
    %47 = vector.extract_strided_slice %7 {offsets = [3, 0], sizes = [1, 128], strides = [1, 1]} : vector<4x128xf32> to vector<1x128xf32>
    %48 = vector.broadcast %46 : f32 to vector<1x128xf32>
    %49 = arith.mulf %48, %47 : vector<1x128xf32>
    %50 = arith.addf %45, %49 : vector<1x128xf32>
    %c0_20 = arith.constant 0 : index
    %c1_21 = arith.constant 1 : index
    %51 = memref.load %arg4[%c0_20, %c1_21] : memref<1x4xf32, #tpu.memory_space<smem>>
    %52 = vector.broadcast %51 : f32 to vector<1x128xf32>
    %53 = arith.addf %50, %52 : vector<1x128xf32>
    %cst_22 = arith.constant 0.000000e+00 : f32
    %54 = vector.broadcast %cst_22 : f32 to vector<1x128xf32>
    %55 = arith.maximumf %53, %54 : vector<1x128xf32>
    %c2_23 = arith.constant 2 : index
    %c0_24 = arith.constant 0 : index
    %56 = memref.load %arg3[%c2_23, %c0_24] : memref<4x4xf32, #tpu.memory_space<smem>>
    %57 = vector.extract_strided_slice %7 {offsets = [0, 0], sizes = [1, 128], strides = [1, 1]} : vector<4x128xf32> to vector<1x128xf32>
    %58 = vector.broadcast %56 : f32 to vector<1x128xf32>
    %59 = arith.mulf %58, %57 : vector<1x128xf32>
    %c2_25 = arith.constant 2 : index
    %c1_26 = arith.constant 1 : index
    %60 = memref.load %arg3[%c2_25, %c1_26] : memref<4x4xf32, #tpu.memory_space<smem>>
    %61 = vector.extract_strided_slice %7 {offsets = [1, 0], sizes = [1, 128], strides = [1, 1]} : vector<4x128xf32> to vector<1x128xf32>
    %62 = vector.broadcast %60 : f32 to vector<1x128xf32>
    %63 = arith.mulf %62, %61 : vector<1x128xf32>
    %64 = arith.addf %59, %63 : vector<1x128xf32>
    %c2_27 = arith.constant 2 : index
    %c2_28 = arith.constant 2 : index
    %65 = memref.load %arg3[%c2_27, %c2_28] : memref<4x4xf32, #tpu.memory_space<smem>>
    %66 = vector.extract_strided_slice %7 {offsets = [2, 0], sizes = [1, 128], strides = [1, 1]} : vector<4x128xf32> to vector<1x128xf32>
    %67 = vector.broadcast %65 : f32 to vector<1x128xf32>
    %68 = arith.mulf %67, %66 : vector<1x128xf32>
    %69 = arith.addf %64, %68 : vector<1x128xf32>
    %c2_29 = arith.constant 2 : index
    %c3_30 = arith.constant 3 : index
    %70 = memref.load %arg3[%c2_29, %c3_30] : memref<4x4xf32, #tpu.memory_space<smem>>
    %71 = vector.extract_strided_slice %7 {offsets = [3, 0], sizes = [1, 128], strides = [1, 1]} : vector<4x128xf32> to vector<1x128xf32>
    %72 = vector.broadcast %70 : f32 to vector<1x128xf32>
    %73 = arith.mulf %72, %71 : vector<1x128xf32>
    %74 = arith.addf %69, %73 : vector<1x128xf32>
    %c0_31 = arith.constant 0 : index
    %c2_32 = arith.constant 2 : index
    %75 = memref.load %arg4[%c0_31, %c2_32] : memref<1x4xf32, #tpu.memory_space<smem>>
    %76 = vector.broadcast %75 : f32 to vector<1x128xf32>
    %77 = arith.addf %74, %76 : vector<1x128xf32>
    %cst_33 = arith.constant 0.000000e+00 : f32
    %78 = vector.broadcast %cst_33 : f32 to vector<1x128xf32>
    %79 = arith.maximumf %77, %78 : vector<1x128xf32>
    %c3_34 = arith.constant 3 : index
    %c0_35 = arith.constant 0 : index
    %80 = memref.load %arg3[%c3_34, %c0_35] : memref<4x4xf32, #tpu.memory_space<smem>>
    %81 = vector.extract_strided_slice %7 {offsets = [0, 0], sizes = [1, 128], strides = [1, 1]} : vector<4x128xf32> to vector<1x128xf32>
    %82 = vector.broadcast %80 : f32 to vector<1x128xf32>
    %83 = arith.mulf %82, %81 : vector<1x128xf32>
    %c3_36 = arith.constant 3 : index
    %c1_37 = arith.constant 1 : index
    %84 = memref.load %arg3[%c3_36, %c1_37] : memref<4x4xf32, #tpu.memory_space<smem>>
    %85 = vector.extract_strided_slice %7 {offsets = [1, 0], sizes = [1, 128], strides = [1, 1]} : vector<4x128xf32> to vector<1x128xf32>
    %86 = vector.broadcast %84 : f32 to vector<1x128xf32>
    %87 = arith.mulf %86, %85 : vector<1x128xf32>
    %88 = arith.addf %83, %87 : vector<1x128xf32>
    %c3_38 = arith.constant 3 : index
    %c2_39 = arith.constant 2 : index
    %89 = memref.load %arg3[%c3_38, %c2_39] : memref<4x4xf32, #tpu.memory_space<smem>>
    %90 = vector.extract_strided_slice %7 {offsets = [2, 0], sizes = [1, 128], strides = [1, 1]} : vector<4x128xf32> to vector<1x128xf32>
    %91 = vector.broadcast %89 : f32 to vector<1x128xf32>
    %92 = arith.mulf %91, %90 : vector<1x128xf32>
    %93 = arith.addf %88, %92 : vector<1x128xf32>
    %c3_40 = arith.constant 3 : index
    %c3_41 = arith.constant 3 : index
    %94 = memref.load %arg3[%c3_40, %c3_41] : memref<4x4xf32, #tpu.memory_space<smem>>
    %95 = vector.extract_strided_slice %7 {offsets = [3, 0], sizes = [1, 128], strides = [1, 1]} : vector<4x128xf32> to vector<1x128xf32>
    %96 = vector.broadcast %94 : f32 to vector<1x128xf32>
    %97 = arith.mulf %96, %95 : vector<1x128xf32>
    %98 = arith.addf %93, %97 : vector<1x128xf32>
    %c0_42 = arith.constant 0 : index
    %c3_43 = arith.constant 3 : index
    %99 = memref.load %arg4[%c0_42, %c3_43] : memref<1x4xf32, #tpu.memory_space<smem>>
    %100 = vector.broadcast %99 : f32 to vector<1x128xf32>
    %101 = arith.addf %98, %100 : vector<1x128xf32>
    %cst_44 = arith.constant 0.000000e+00 : f32
    %102 = vector.broadcast %cst_44 : f32 to vector<1x128xf32>
    %103 = arith.maximumf %101, %102 : vector<1x128xf32>
    %c0_45 = arith.constant 0 : index
    %c0_46 = arith.constant 0 : index
    %c0_47 = arith.constant 0 : index
    %104 = vector.load %arg6[%c0_45, %c0_46, %c0_47] : memref<1x4x128xf32, #tpu.memory_space<vmem>>, vector<1x4x128xf32>
    %105 = vector.shape_cast %104 : vector<1x4x128xf32> to vector<4x128xf32>
    %106 = vector.extract_strided_slice %105 {offsets = [0, 0], sizes = [1, 128], strides = [1, 1]} : vector<4x128xf32> to vector<1x128xf32>
    %107 = arith.mulf %31, %106 : vector<1x128xf32>
    %108 = vector.extract_strided_slice %105 {offsets = [2, 0], sizes = [1, 128], strides = [1, 1]} : vector<4x128xf32> to vector<1x128xf32>
    %109 = arith.mulf %79, %108 : vector<1x128xf32>
    %110 = arith.subf %107, %109 : vector<1x128xf32>
    %111 = vector.extract_strided_slice %105 {offsets = [1, 0], sizes = [1, 128], strides = [1, 1]} : vector<4x128xf32> to vector<1x128xf32>
    %112 = arith.mulf %55, %111 : vector<1x128xf32>
    %113 = vector.extract_strided_slice %105 {offsets = [3, 0], sizes = [1, 128], strides = [1, 1]} : vector<4x128xf32> to vector<1x128xf32>
    %114 = arith.mulf %103, %113 : vector<1x128xf32>
    %115 = arith.subf %112, %114 : vector<1x128xf32>
    %116 = vector.extract_strided_slice %105 {offsets = [2, 0], sizes = [1, 128], strides = [1, 1]} : vector<4x128xf32> to vector<1x128xf32>
    %117 = arith.mulf %31, %116 : vector<1x128xf32>
    %118 = vector.extract_strided_slice %105 {offsets = [0, 0], sizes = [1, 128], strides = [1, 1]} : vector<4x128xf32> to vector<1x128xf32>
    %119 = arith.mulf %79, %118 : vector<1x128xf32>
    %120 = arith.addf %117, %119 : vector<1x128xf32>
    %121 = vector.extract_strided_slice %105 {offsets = [3, 0], sizes = [1, 128], strides = [1, 1]} : vector<4x128xf32> to vector<1x128xf32>
    %122 = arith.mulf %55, %121 : vector<1x128xf32>
    %123 = vector.extract_strided_slice %105 {offsets = [1, 0], sizes = [1, 128], strides = [1, 1]} : vector<4x128xf32> to vector<1x128xf32>
    %124 = arith.mulf %103, %123 : vector<1x128xf32>
    %125 = arith.addf %122, %124 : vector<1x128xf32>
    %126 = tpu.concatenate %110, %115, %120, %125 in 0 : vector<1x128xf32>, vector<1x128xf32>, vector<1x128xf32>, vector<1x128xf32> -> vector<4x128xf32>
    %c0_48 = arith.constant 0 : index
    %c0_49 = arith.constant 0 : index
    %c0_50 = arith.constant 0 : index
    %127 = vector.load %arg7[%c0_48, %c0_49, %c0_50] : memref<1x4x128xf32, #tpu.memory_space<vmem>>, vector<1x4x128xf32>
    %128 = vector.shape_cast %127 : vector<1x4x128xf32> to vector<4x128xf32>
    %129 = vector.shape_cast %126 : vector<4x128xf32> to vector<1x4x128xf32>
    tpu.vector_store %arg7[%c0_48, %c0_49, %c0_50], %129 {strides = array<i32>} : memref<1x4x128xf32, #tpu.memory_space<vmem>>, vector<1x4x128xf32>,
    return
  }
  func.func @transform_0(%arg0: i32, %arg1: i32) -> (i32, i32) {
    %c0_i32 = arith.constant 0 : i32
    %c0_i32_0 = arith.constant 0 : i32
    %c0_i32_1 = arith.constant 0 : i32
    return %c0_i32, %c0_i32_0 : i32, i32
  }
  func.func @transform_1(%arg0: i32, %arg1: i32) -> (i32, i32) {
    %c0_i32 = arith.constant 0 : i32
    %c0_i32_0 = arith.constant 0 : i32
    %c0_i32_1 = arith.constant 0 : i32
    return %c0_i32, %c0_i32_0 : i32, i32
  }
  func.func @transform_2(%arg0: i32, %arg1: i32) -> (i32, i32) {
    %c0_i32 = arith.constant 0 : i32
    %c0_i32_0 = arith.constant 0 : i32
    %c0_i32_1 = arith.constant 0 : i32
    return %c0_i32, %c0_i32_0 : i32, i32
  }
  func.func @transform_3(%arg0: i32, %arg1: i32) -> (i32, i32, i32) {
    %c0_i32 = arith.constant 0 : i32
    %c0_i32_0 = arith.constant 0 : i32
    return %arg0, %c0_i32, %arg1 : i32, i32, i32
  }
  func.func @transform_4(%arg0: i32, %arg1: i32) -> (i32, i32, i32) {
    %c0_i32 = arith.constant 0 : i32
    %c0_i32_0 = arith.constant 0 : i32
    return %arg0, %c0_i32, %arg1 : i32, i32, i32
  }
  func.func @transform_5(%arg0: i32, %arg1: i32) -> (i32, i32, i32) {
    %c0_i32 = arith.constant 0 : i32
    %c0_i32_0 = arith.constant 0 : i32
    return %arg0, %c0_i32, %arg1 : i32, i32, i32
  }
}

</mosaic_0001>

<llo_original>
// kernel: s3_forward.1
$region0: #{s3_forward.1}
  #allocation0 [shape = 'u32[]', space=smem, size = 0x4, offset = 0x4, fixed_abs, tag = 'smem constant byte address 0x4 - core index']
  #allocation1 [shape = 'u32[72,128]{1,0:T(1,128)}', space=vmem, size = 0x9000, scoped, tag = 'internal scratch']
  #allocation2 [shape = 'f32[1,1]{1,0:T(1,128)S(6)}', space=smem, size = 0x200, scoped, tag = 'scoped memory for s3_forward.1']
  %s0 = inlined_call_operand.<no memory space> [shape: f32[1,1], index: 0, kind: input, shape index: {}]
  %s1 = inlined_call_operand.vmem [shape: f32[4,4], index: 1, kind: input, shape index: {}]
  %s2 = inlined_call_operand.vmem [shape: f32[1,4], index: 2, kind: input, shape index: {}]
  %s3 = inlined_call_operand.vmem [shape: f32[2,4,256], index: 3, kind: input, shape index: {}]
  %s4 = inlined_call_operand.vmem [shape: f32[2,4,256], index: 4, kind: input, shape index: {}]
  %s5 = inlined_call_operand.vmem [shape: f32[2,4,256], index: 5, kind: output, shape index: {}]
  %s6 = sld [smem:[#allocation0]]
  $region61: #{s3_forward.1} parent=0
    _
  %s8 = ssub.s32 1, %s6
  %s9 = scalar_select 0, %s8, %s6
  %10 = sst [smem:[#allocation2]] %s0
  $region1: #{s3_forward.1} parent=0
    #allocation3 [shape = 'u8[2048]{0}', space=smem, size = 0x800, scoped, tag = 'input window, operand 1, single buffered']
    #allocation4 [shape = 's32[2]{0}', space=sflag, size = 0x8, scoped, tag = 'scoped memory for s3_forward.1']
    #allocation5 [shape = 'u8[512]{0}', space=smem, size = 0x200, scoped, tag = 'input window, operand 2, single buffered']
    #allocation6 [shape = 's32[1]{0}', space=sflag, size = 0x4, scoped, tag = 'scoped memory for s3_forward.1']
    %11 = vsyncpa [#allocation4], 0
    %12 = vsyncpa [#allocation6], 0
    loop: start=0, step=1, limit=6
    $region2: #{s3_forward.1} parent=1 // loop_pre_header
      _
    $region3: #{s3_forward.1} parent=1 // loop_header
      %s14 = sphi 0, %s18
      %p15 = scmp.ge.s32.totalorder %s14, 6
      %s21 = sphi 0, %s33
      %s22 = sphi 0, %s29
      %s23 = sphi 0, %s21
      %s24 = sphi 0, %s22
      %s25 = sphi 0, %s23
      %s26 = sphi 0, %s24
      %s34 = sphi 0, %s34
      %s36 = sphi 0, %s34
      %s37 = sphi 0, %s36
      %s51 = sphi 0, %s37
      %s55 = sphi 0, %s55
      %s57 = sphi 0, %s55
      %s58 = sphi 0, %s57
      %s72 = sphi 0, %s58
      %s76 = sphi 0, %s76
      %s78 = sphi 0, %s76
      %s79 = sphi 0, %s78
      %s93 = sphi 0, %s79
      %s101 = sphi 0, %s103
      %s104 = sphi 0, %s101
      %s105 = sphi 0, %s104
      %s121 = sphi 0, %s105
      %s129 = sphi 0, %s131
      %s132 = sphi 0, %s129
      %s133 = sphi 0, %s132
      %s149 = sphi 0, %s133
      %s157 = sphi 0, %s159
      %s160 = sphi 0, %s157
      %s161 = sphi 0, %s160
      %s177 = sphi 0, %s161
    $region4: #{s3_forward.1} parent=1 // loop_header_branch
      %17 = sbr.rel (%p15) target = $region8
    $region5: #{s3_forward.1} parent=1 // loop_body
      %s19 = ssub.s32 %s14, 1
      %s20 = ssub.s32 %s14, 2
      %s27 = sadd.s32 1, %s22
      %p28 = scmp.ge.s32.totalorder %s27, 2
      %s29 = scalar_select %p28, 0, %s27
      %s30 = sadd.s32 1, %s21
      %s31 = scalar_select %p28, %s30, %s21
      %p32 = scmp.ge.s32.totalorder %s31, 2
      %s33 = scalar_select %p32, 0, %s31
      %s35 = sadd.s32 %s34, 1
      %p38 = scmp.eq.s32.totalorder %s14, 3
      %p39 = scmp.ne.s32.totalorder %s34, %s36
      %p40 = scmp.eq.s32.totalorder %s14, 0
      %p41 = por %p39, %p40
      %p42 = scmp.ne.s32.totalorder %s34, %s36
      %p43 = scmp.eq.s32.totalorder %s19, 3
      %p44 = por %p42, %p43
      %p45 = scmp.ne.s32.totalorder %s36, %s37
      %p46 = scmp.eq.s32.totalorder %s19, 0
      %p47 = por %p45, %p46
      %p48 = scmp.ne.s32.totalorder %s36, %s37
      %p49 = scmp.eq.s32.totalorder %s20, 3
      %p50 = por %p48, %p49
      %p52 = scmp.ne.s32.totalorder %s37, %s51
      %p53 = scmp.eq.s32.totalorder %s20, 0
      %p54 = por %p52, %p53
      %s56 = sadd.s32 %s55, 1
      %p59 = scmp.eq.s32.totalorder %s14, 3
      %p60 = scmp.ne.s32.totalorder %s55, %s57
      %p61 = scmp.eq.s32.totalorder %s14, 0
      %p62 = por %p60, %p61
      %p63 = scmp.ne.s32.totalorder %s55, %s57
      %p64 = scmp.eq.s32.totalorder %s19, 3
      %p65 = por %p63, %p64
      %p66 = scmp.ne.s32.totalorder %s57, %s58
      %p67 = scmp.eq.s32.totalorder %s19, 0
      %p68 = por %p66, %p67
      %p69 = scmp.ne.s32.totalorder %s57, %s58
      %p70 = scmp.eq.s32.totalorder %s20, 3
      %p71 = por %p69, %p70
      %p73 = scmp.ne.s32.totalorder %s58, %s72
      %p74 = scmp.eq.s32.totalorder %s20, 0
      %p75 = por %p73, %p74
      %s77 = sadd.s32 %s76, 1
      %p80 = scmp.eq.s32.totalorder %s14, 3
      %p81 = scmp.ne.s32.totalorder %s76, %s78
      %p82 = scmp.eq.s32.totalorder %s14, 0
      %p83 = por %p81, %p82
      %p84 = scmp.ne.s32.totalorder %s76, %s78
      %p85 = scmp.eq.s32.totalorder %s19, 3
      %p86 = por %p84, %p85
      %p87 = scmp.ne.s32.totalorder %s78, %s79
      %p88 = scmp.eq.s32.totalorder %s19, 0
      %p89 = por %p87, %p88
      %p90 = scmp.ne.s32.totalorder %s78, %s79
      %p91 = scmp.eq.s32.totalorder %s20, 3
      %p92 = por %p90, %p91
      %p94 = scmp.ne.s32.totalorder %s79, %s93
      %p95 = scmp.eq.s32.totalorder %s20, 0
      %p96 = por %p94, %p95
      %s97 = ssub.s32 %s21, %s33
      %s98 = ssub.s32 %s22, %s29
      %s99 = sor.u32 %s97, %s98
      %p100 = scmp.eq.s32.totalorder %s99, 0
      %s102 = sadd.s32 %s101, 1
      %s103 = scalar_select %p100, %s101, %s102
      %p106 = pneg %p100
      %p107 = scmp.eq.s32.totalorder %s14, 3
      %p108 = por %p106, %p107
      %p109 = scmp.ne.s32.totalorder %s101, %s104
      %p110 = scmp.eq.s32.totalorder %s14, 0
      %p111 = por %p109, %p110
      %p112 = scmp.ne.s32.totalorder %s101, %s104
      %p113 = scmp.eq.s32.totalorder %s19, 3
      %p114 = por %p112, %p113
      %p115 = scmp.ne.s32.totalorder %s104, %s105
      %p116 = scmp.eq.s32.totalorder %s19, 0
      %p117 = por %p115, %p116
      %p118 = scmp.ne.s32.totalorder %s104, %s105
      %p119 = scmp.eq.s32.totalorder %s20, 3
      %p120 = por %p118, %p119
      %p122 = scmp.ne.s32.totalorder %s105, %s121
      %p123 = scmp.eq.s32.totalorder %s20, 0
      %p124 = por %p122, %p123
      %s125 = ssub.s32 %s21, %s33
      %s126 = ssub.s32 %s22, %s29
      %s127 = sor.u32 %s125, %s126
      %p128 = scmp.eq.s32.totalorder %s127, 0
      %s130 = sadd.s32 %s129, 1
      %s131 = scalar_select %p128, %s129, %s130
      %p134 = pneg %p128
      %p135 = scmp.eq.s32.totalorder %s14, 3
      %p136 = por %p134, %p135
      %p137 = scmp.ne.s32.totalorder %s129, %s132
      %p138 = scmp.eq.s32.totalorder %s14, 0
      %p139 = por %p137, %p138
      %p140 = scmp.ne.s32.totalorder %s129, %s132
      %p141 = scmp.eq.s32.totalorder %s19, 3
      %p142 = por %p140, %p141
      %p143 = scmp.ne.s32.totalorder %s132, %s133
      %p144 = scmp.eq.s32.totalorder %s19, 0
      %p145 = por %p143, %p144
      %p146 = scmp.ne.s32.totalorder %s132, %s133
      %p147 = scmp.eq.s32.totalorder %s20, 3
      %p148 = por %p146, %p147
      %p150 = scmp.ne.s32.totalorder %s133, %s149
      %p151 = scmp.eq.s32.totalorder %s20, 0
      %p152 = por %p150, %p151
      %s153 = ssub.s32 %s21, %s33
      %s154 = ssub.s32 %s22, %s29
      %s155 = sor.u32 %s153, %s154
      %p156 = scmp.eq.s32.totalorder %s155, 0
      %s158 = sadd.s32 %s157, 1
      %s159 = scalar_select %p156, %s157, %s158
      %p162 = pneg %p156
      %p163 = scmp.eq.s32.totalorder %s14, 3
      %p164 = por %p162, %p163
      %p165 = scmp.ne.s32.totalorder %s157, %s160
      %p166 = scmp.eq.s32.totalorder %s14, 0
      %p167 = por %p165, %p166
      %p168 = scmp.ne.s32.totalorder %s157, %s160
      %p169 = scmp.eq.s32.totalorder %s19, 3
      %p170 = por %p168, %p169
      %p171 = scmp.ne.s32.totalorder %s160, %s161
      %p172 = scmp.eq.s32.totalorder %s19, 0
      %p173 = por %p171, %p172
      %p174 = scmp.ne.s32.totalorder %s160, %s161
      %p175 = scmp.eq.s32.totalorder %s20, 3
      %p176 = por %p174, %p175
      %p178 = scmp.ne.s32.totalorder %s161, %s177
      %p179 = scmp.eq.s32.totalorder %s20, 0
      %p180 = por %p178, %p179
      %p181 = scmp.le.s32.totalorder 1, %s14
      %p182 = scmp.lt.s32.totalorder %s14, 5
      %p183 = pnand %p181, %p182
      %p184 = pneg %p183
      // Predicated region
      $region9: #{s3_forward.1} parent=5 // pred_check
        _
      $region10: #{s3_forward.1} parent=5 // pred_check_branch
        %186 = sbr.rel (%p183) target = $region12
      $region11: #{s3_forward.1} parent=5 // pred_region
        %s187 = ssub.s32 %s14, 1
        // Predicated region
        $region13: #{s3_forward.1} parent=11 // pred_check
          %p188 = pneg %p47
        $region14: #{s3_forward.1} parent=11 // pred_check_branch
          %190 = sbr.rel (%p188) target = $region16
        $region15: #{s3_forward.1} parent=11 // pred_region
          _
        $region16: #{s3_forward.1} parent=11 // pred_fallthru
          _
        // Predicated region
        $region17: #{s3_forward.1} parent=11 // pred_check
          %p191 = pneg %p68
        $region18: #{s3_forward.1} parent=11 // pred_check_branch
          %193 = sbr.rel (%p191) target = $region20
        $region19: #{s3_forward.1} parent=11 // pred_region
          %195 = vsyncadd [#allocation4], 0
          %s197 = sshll.u32 %s1, 4
          %s198 = int_to_ptr.vmem [resolvable:$true] %s197
          %200 = dma.vmem_to_smem %s198, 64, [#allocation3], [#allocation4]
        $region20: #{s3_forward.1} parent=11 // pred_fallthru
          _
        // Predicated region
        $region21: #{s3_forward.1} parent=11 // pred_check
          %p201 = pneg %p89
        $region22: #{s3_forward.1} parent=11 // pred_check_branch
          %203 = sbr.rel (%p201) target = $region24
        $region23: #{s3_forward.1} parent=11 // pred_region
          %205 = vsyncadd [#allocation6], 0
          %s207 = sshll.u32 %s2, 4
          %s208 = int_to_ptr.vmem [resolvable:$true] %s207
          %210 = dma.vmem_to_smem %s208, 16, [#allocation5], [#allocation6]
        $region24: #{s3_forward.1} parent=11 // pred_fallthru
          _
      $region12: #{s3_forward.1} parent=5 // pred_fallthru
        _
      %p211 = scmp.lt.s32.totalorder %s14, 4
      // Predicated region
      $region25: #{s3_forward.1} parent=5 // pred_check
        %p212 = pneg %p211
      $region26: #{s3_forward.1} parent=5 // pred_check_branch
        %214 = sbr.rel (%p212) target = $region28
      $region27: #{s3_forward.1} parent=5 // pred_region
        // Predicated region
        $region29: #{s3_forward.1} parent=27 // pred_check
          %p215 = pneg %p111
        $region30: #{s3_forward.1} parent=27 // pred_check_branch
          %217 = sbr.rel (%p215) target = $region32
        $region31: #{s3_forward.1} parent=27 // pred_region
          %p218 = scmp.lt.s32.totalorder %s21, 1
          %s219 = scalar_select %p218, %s21, 1
          %p220 = scmp.lt.s32.totalorder %s22, 1
          %s221 = scalar_select %p220, %s22, 1
          %s222 = smul.addr %s219, 2
          %s223 = sadd.s32 %s221, %s222
          %s224 = smul.addr %s223, 4
          %s225 = scalar_lea.vmem %s3, %s224
        $region32: #{s3_forward.1} parent=27 // pred_fallthru
          _
        // Predicated region
        $region33: #{s3_forward.1} parent=27 // pred_check
          %p226 = pneg %p139
        $region34: #{s3_forward.1} parent=27 // pred_check_branch
          %228 = sbr.rel (%p226) target = $region36
        $region35: #{s3_forward.1} parent=27 // pred_region
          %p229 = scmp.lt.s32.totalorder %s21, 1
          %s230 = scalar_select %p229, %s21, 1
          %p231 = scmp.lt.s32.totalorder %s22, 1
          %s232 = scalar_select %p231, %s22, 1
          %s233 = smul.addr %s230, 2
          %s234 = sadd.s32 %s232, %s233
          %s235 = smul.addr %s234, 4
          %s236 = scalar_lea.vmem %s4, %s235
        $region36: #{s3_forward.1} parent=27 // pred_fallthru
          _
      $region28: #{s3_forward.1} parent=5 // pred_fallthru
        _
      %p237 = scmp.le.s32.totalorder 1, %s14
      %p238 = scmp.lt.s32.totalorder %s14, 5
      %p239 = pnand %p237, %p238
      %p240 = pneg %p239
      // Predicated region
      $region37: #{s3_forward.1} parent=5 // pred_check
        _
      $region38: #{s3_forward.1} parent=5 // pred_check_branch
        %242 = sbr.rel (%p239) target = $region40
      $region39: #{s3_forward.1} parent=5 // pred_region
        %s243 = ssub.s32 %s14, 1
        // Predicated region
        $region41: #{s3_forward.1} parent=39 // pred_check
          %p244 = pneg %p68
        $region42: #{s3_forward.1} parent=39 // pred_check_branch
          %246 = sbr.rel (%p244) target = $region44
        $region43: #{s3_forward.1} parent=39 // pred_region
          %248 = dma.done [#allocation4], 64
        $region44: #{s3_forward.1} parent=39 // pred_fallthru
          _
        // Predicated region
        $region45: #{s3_forward.1} parent=39 // pred_check
          %p249 = pneg %p89
        $region46: #{s3_forward.1} parent=39 // pred_check_branch
          %251 = sbr.rel (%p249) target = $region48
        $region47: #{s3_forward.1} parent=39 // pred_region
          %253 = dma.done [#allocation6], 16
        $region48: #{s3_forward.1} parent=39 // pred_fallthru
          _
        %254 = sfence
        %p255 = pneg %p47
        %p256 = pneg %p44
        %p257 = pneg %p68
        %p258 = pneg %p65
        %p259 = pneg %p89
        %p260 = pneg %p86
        %p261 = scmp.lt.s32.totalorder %s23, 1
        %s262 = scalar_select %p261, %s23, 1
        %p263 = scmp.lt.s32.totalorder %s24, 1
        %s264 = scalar_select %p263, %s24, 1
        %s265 = smul.addr %s262, 2
        %s266 = sadd.s32 %s264, %s265
        %s267 = smul.addr %s266, 4
        %s268 = scalar_lea.vmem %s3, %s267
        %p269 = pneg %p117
        %p270 = pneg %p114
        %p271 = scmp.lt.s32.totalorder %s23, 1
        %s272 = scalar_select %p271, %s23, 1
        %p273 = scmp.lt.s32.totalorder %s24, 1
        %s274 = scalar_select %p273, %s24, 1
        %s275 = smul.addr %s272, 2
        %s276 = sadd.s32 %s274, %s275
        %s277 = smul.addr %s276, 4
        %s278 = scalar_lea.vmem %s4, %s277
        %p279 = pneg %p145
        %p280 = pneg %p142
        %p281 = pneg %p173
        %p282 = pneg %p170
        %p283 = scmp.lt.s32.totalorder %s23, 1
        %s284 = scalar_select %p283, %s23, 1
        %p285 = scmp.lt.s32.totalorder %s24, 1
        %s286 = scalar_select %p285, %s24, 1
        %s287 = smul.addr %s284, 2
        %s288 = sadd.s32 %s286, %s287
        %s289 = smul.addr %s288, 4
        %s290 = scalar_lea.vmem %s5, %s289
        %p291 = scmp.lt.s32.totalorder %s23, 1
        %s292 = scalar_select %p291, %s23, 1
        %p293 = scmp.lt.s32.totalorder %s24, 1
        %s294 = scalar_select %p293, %s24, 1
        %s295 = smul.addr %s292, 2
        %s296 = sadd.s32 %s294, %s295
        %s297 = smul.addr %s296, 4
        %s298 = scalar_lea.vmem %s3, %s297
        %p299 = scmp.lt.s32.totalorder %s23, 1
        %s300 = scalar_select %p299, %s23, 1
        %p301 = scmp.lt.s32.totalorder %s24, 1
        %s302 = scalar_select %p301, %s24, 1
        %s303 = smul.addr %s300, 2
        %s304 = sadd.s32 %s302, %s303
        %s305 = smul.addr %s304, 4
        %s306 = scalar_lea.vmem %s4, %s305
        %p307 = scmp.lt.s32.totalorder %s23, 1
        %s308 = scalar_select %p307, %s23, 1
        %p309 = scmp.lt.s32.totalorder %s24, 1
        %s310 = scalar_select %p309, %s24, 1
        %s311 = smul.addr %s308, 2
        %s312 = sadd.s32 %s310, %s311
        %s313 = smul.addr %s312, 4
        %s314 = scalar_lea.vmem %s5, %s313
        %s315 = sld [smem:[#allocation2]]
        %v316 = vld [vmem:[%s298] sm:$0xf]
        %vm317 = vcmp.gt.f32.partialorder %v316, 0.0
        %v318 = vstv %s315
        %v319 = vmul.f32 %v318, %v316
        %v320 = vsel %vm317, %v316, %v319
        %s321 = sld [smem:[#allocation3]]
        %v322 = vstv %s321
        %v323 = vmul.f32 %v322, %v320
        %s324 = sld [smem:[#allocation3 + $0x1]]
        %v325 = vstv %s324
        %v326 = vmul.f32 %v325, %v320
        %v328 = vrot.slane %v326, 1
        %v330 = vadd.f32 %v323, %v328
        %s331 = sld [smem:[#allocation3 + $0x2]]
        %v332 = vstv %s331
        %v333 = vmul.f32 %v332, %v320
        %v335 = vrot.slane %v333, 2
        %v337 = vadd.f32 %v330, %v335
        %s338 = sld [smem:[#allocation3 + $0x3]]
        %v339 = vstv %s338
        %v340 = vmul.f32 %v339, %v320
        %v342 = vrot.slane %v340, 3
        %v344 = vadd.f32 %v337, %v342
        %s345 = sld [smem:[#allocation5]]
        %v346 = vstv %s345
        %v347 = vadd.f32 %v344, %v346
        %v348 = vmax.f32 %v347, 0.0
        %s349 = sld [smem:[#allocation3 + $0x80]]
        %v350 = vstv %s349
        %v351 = vmul.f32 %v350, %v320
        %s352 = sld [smem:[#allocation3 + $0x81]]
        %v353 = vstv %s352
        %v354 = vmul.f32 %v353, %v320
        %v356 = vrot.slane %v354, 1
        %v358 = vadd.f32 %v351, %v356
        %s359 = sld [smem:[#allocation3 + $0x82]]
        %v360 = vstv %s359
        %v361 = vmul.f32 %v360, %v320
        %v363 = vrot.slane %v361, 2
        %v365 = vadd.f32 %v358, %v363
        %s366 = sld [smem:[#allocation3 + $0x83]]
        %v367 = vstv %s366
        %v368 = vmul.f32 %v367, %v320
        %v370 = vrot.slane %v368, 3
        %v372 = vadd.f32 %v365, %v370
        %s373 = sld [smem:[#allocation5 + $0x1]]
        %v374 = vstv %s373
        %v375 = vadd.f32 %v372, %v374
        %v376 = vmax.f32 %v375, 0.0
        %s377 = sld [smem:[#allocation3 + $0x100]]
        %v378 = vstv %s377
        %v379 = vmul.f32 %v378, %v320
        %s380 = sld [smem:[#allocation3 + $0x101]]
        %v381 = vstv %s380
        %v382 = vmul.f32 %v381, %v320
        %v384 = vrot.slane %v382, 1
        %v386 = vadd.f32 %v379, %v384
        %s387 = sld [smem:[#allocation3 + $0x102]]
        %v388 = vstv %s387
        %v389 = vmul.f32 %v388, %v320
        %v391 = vrot.slane %v389, 2
        %v393 = vadd.f32 %v386, %v391
        %s394 = sld [smem:[#allocation3 + $0x103]]
        %v395 = vstv %s394
        %v396 = vmul.f32 %v395, %v320
        %v398 = vrot.slane %v396, 3
        %v400 = vadd.f32 %v393, %v398
        %s401 = sld [smem:[#allocation5 + $0x2]]
        %v402 = vstv %s401
        %v403 = vadd.f32 %v400, %v402
        %v404 = vmax.f32 %v403, 0.0
        %s405 = sld [smem:[#allocation3 + $0x180]]
        %v406 = vstv %s405
        %v407 = vmul.f32 %v406, %v320
        %s408 = sld [smem:[#allocation3 + $0x181]]
        %v409 = vstv %s408
        %v410 = vmul.f32 %v409, %v320
        %v412 = vrot.slane %v410, 1
        %v414 = vadd.f32 %v407, %v412
        %s415 = sld [smem:[#allocation3 + $0x182]]
        %v416 = vstv %s415
        %v417 = vmul.f32 %v416, %v320
        %v419 = vrot.slane %v417, 2
        %v421 = vadd.f32 %v414, %v419
        %s422 = sld [smem:[#allocation3 + $0x183]]
        %v423 = vstv %s422
        %v424 = vmul.f32 %v423, %v320
        %v426 = vrot.slane %v424, 3
        %v428 = vadd.f32 %v421, %v426
        %s429 = sld [smem:[#allocation5 + $0x3]]
        %v430 = vstv %s429
        %v431 = vadd.f32 %v428, %v430
        %v432 = vmax.f32 %v431, 0.0
        %v433 = vld [vmem:[%s306] sm:$0xf]
        %v434 = vmul.f32 %v348, %v433
        %v436 = vrot.slane %v433, 2
        %v438 = vmul.f32 %v404, %v436
        %v439 = vsub.f32 %v434, %v438
        %v440 = vrot.slane %v433, 1
        %v442 = vmul.f32 %v376, %v440
        %v443 = vrot.slane %v433, 3
        %v445 = vmul.f32 %v432, %v443
        %v446 = vsub.f32 %v442, %v445
        %v447 = vmul.f32 %v348, %v436
        %v448 = vmul.f32 %v404, %v433
        %v449 = vadd.f32 %v447, %v448
        %v450 = vmul.f32 %v376, %v443
        %v451 = vmul.f32 %v432, %v440
        %v452 = vadd.f32 %v450, %v451
        %v454 = vrot.slane %v446, 7
        %v457 = vrot.slane %v449, 6
        %v460 = vrot.slane %v452, 5
        %vm462 = vcmask 1040384
        %v463 = vsel %vm462, %v439, %v454
        %vm464 = vcmask 1041408
        %v465 = vsel %vm464, %v463, %v457
        %vm466 = vcmask 1042432
        %v467 = vsel %vm466, %v465, %v460
        %468 = vst [vmem:[%s314] sm:$0xf] %v467
        %p469 = scmp.lt.s32.totalorder %s23, 1
        %s470 = scalar_select %p469, %s23, 1
        %p471 = scmp.lt.s32.totalorder %s24, 1
        %s472 = scalar_select %p471, %s24, 1
        %s473 = smul.addr %s470, 2
        %s474 = sadd.s32 %s472, %s473
        %s475 = smul.addr %s474, 4
        %s476 = scalar_lea.vmem %s5, %s475
        // Predicated region
        $region49: #{s3_forward.1} parent=39 // pred_check
          %p477 = pneg %p170
        $region50: #{s3_forward.1} parent=39 // pred_check_branch
          %479 = sbr.rel (%p477) target = $region52
        $region51: #{s3_forward.1} parent=39 // pred_region
          _
        $region52: #{s3_forward.1} parent=39 // pred_fallthru
          _
      $region40: #{s3_forward.1} parent=5 // pred_fallthru
        _
      %p480 = scmp.le.s32.totalorder 2, %s14
      // Predicated region
      $region53: #{s3_forward.1} parent=5 // pred_check
        %p481 = pneg %p480
      $region54: #{s3_forward.1} parent=5 // pred_check_branch
        %483 = sbr.rel (%p481) target = $region56
      $region55: #{s3_forward.1} parent=5 // pred_region
        %s484 = ssub.s32 %s14, 2
        // Predicated region
        $region57: #{s3_forward.1} parent=55 // pred_check
          %p485 = pneg %p176
        $region58: #{s3_forward.1} parent=55 // pred_check_branch
          %487 = sbr.rel (%p485) target = $region60
        $region59: #{s3_forward.1} parent=55 // pred_region
          %p488 = scmp.lt.s32.totalorder %s25, 1
          %s489 = scalar_select %p488, %s25, 1
          %p490 = scmp.lt.s32.totalorder %s26, 1
          %s491 = scalar_select %p490, %s26, 1
          %s492 = smul.addr %s489, 2
          %s493 = sadd.s32 %s491, %s492
          %s494 = smul.addr %s493, 4
          %s495 = scalar_lea.vmem %s5, %s494
        $region60: #{s3_forward.1} parent=55 // pred_fallthru
          _
      $region56: #{s3_forward.1} parent=5 // pred_fallthru
        _
    $region6: #{s3_forward.1} parent=1 // loop_footer
      %s18 = sadd.s32 1, %s14
    $region7: #{s3_forward.1} parent=1 // loop_footer_branch
      %13 = sbr.rel target = $region3
    $region8: #{s3_forward.1} parent=1 // loop_exit
      _
    %496 = vsyncpa [#allocation4], 1
    %s497 = scalar_lea.sflag [#allocation4], 1
    %498 = vsyncpa %s497, 1
    %499 = vsyncpa [#allocation6], 1

</llo_original>
